<compile_context>
chip_gen: v7x
topology: tpu7x:2x2x1
jax: 0.10.0
libtpu: 0.0.40
codegen_flags: <defaults>
</compile_context>

<pallas_src>
import functools

import jax
import jax.numpy as jnp
from jax.experimental import pallas as pl
from jax.experimental.pallas import tpu as pltpu

EPS = 1e-5      # BatchNorm2d default eps
LANE = 128
SUBLANE = 8
VMEM_LIMIT = 48 * 1024 * 1024   # explicit scoped-VMEM budget (safe on v5e/v6e/v7x)


def _round_up(x, m):
    return (x + m - 1) // m * m


# --------------- Pass 1: conv-as-matmul + per-channel sum / sum-of-squares ---------

def _conv_stats_kernel(patches_ref, w_ref, y_ref, sum_ref, ssq_ref):
    i = pl.program_id(0)

    @pl.when(i == 0)
    def _():
        sum_ref[...] = jnp.zeros_like(sum_ref)
        ssq_ref[...] = jnp.zeros_like(ssq_ref)

    # bf16 operands, f32 accumulation on the MXU: (TM, Kp) @ (Kp, Cp) -> (TM, Cp).
    y = jnp.dot(patches_ref[...], w_ref[...], preferred_element_type=jnp.float32)
    y_ref[...] = y

    # Batch-stat accumulators: constant block index across the (arbitrary) M axis,
    # so they stay resident in VMEM for the whole grid and are written back once.
    sum_ref[...] += jnp.sum(y, axis=0, keepdims=True)
    ssq_ref[...] += jnp.sum(y * y, axis=0, keepdims=True)


# --------------- Pass 2: fused BN scale/shift + PReLU (per tile, in place) ---------

def _bn_prelu_kernel(y_ref, s_ref, t_ref, a_ref, o_ref):
    y = y_ref[...]
    out = y * s_ref[...] + t_ref[...]                      # one FMA per element
    o_ref[...] = jnp.where(out >= 0.0, out, a_ref[...] * out)


# --------------- Wrapper glue --------------------------------------------------------

def _im2col_reflect(x, k):
    """x: (N, Cin, H, W) NCHW -> (N*H*W, Cin*k*k) patches with reflect 'same' padding."""
    N, Cin, H, W = x.shape
    p = k // 2
    x_pad = jnp.pad(x, ((0, 0), (0, 0), (p, p), (p, p)), mode="reflect")
    cols = []
    for kh in range(k):
        for kw in range(k):
            cols.append(x_pad[:, :, kh:kh + H, kw:kw + W])   # (N, Cin, H, W)
    patches = jnp.stack(cols, axis=2)                        # (N, Cin, k*k, H, W)
    patches = patches.transpose(0, 3, 4, 1, 2)               # (N, H, W, Cin, k*k)
    return patches.reshape(N * H * W, Cin * k * k)


@functools.partial(jax.jit, static_argnames=("k", "tm"))
def down_conv2d(x, weight, gamma, beta, alpha, k, tm=1024):
    """x: (N, Cin, H, W); weight: (Cout, Cin, k, k); gamma/beta/alpha: (Cout,)."""
    N, Cin, H, W = x.shape
    Cout = weight.shape[0]
    M = N * H * W
    K = Cin * k * k

    Kp = _round_up(K, LANE)
    Cp = _round_up(Cout, LANE)
    tm = min(tm, _round_up(M, SUBLANE))
    tm = _round_up(tm, SUBLANE)
    Mp = _round_up(M, tm)
    n_tiles = Mp // tm

    # TODO(synk): move patch extraction in-kernel (halo'd NHWC row tiles + k*k
    # accumulated matmuls) to avoid the k^2 HBM expansion of wrapper-side im2col.
    patches = _im2col_reflect(x, k).astype(jnp.float32)
    patches = jnp.pad(patches, ((0, Mp - M), (0, Kp - K))).astype(jnp.bfloat16)

    w_mat = weight.reshape(Cout, K).T.astype(jnp.float32)            # (K, Cout)
    w_mat = jnp.pad(w_mat, ((0, Kp - K), (0, Cp - Cout))).astype(jnp.bfloat16)

    flops1 = 2 * Mp * Kp * Cp
    bytes1 = Mp * Kp * 2 + Kp * Cp * 2 + Mp * Cp * 4 + 2 * Cp * 4
    y, ch_sum, ch_ssq = pl.pallas_call(
        _conv_stats_kernel,
        out_shape=(
            jax.ShapeDtypeStruct((Mp, Cp), jnp.float32),   # raw conv output
            jax.ShapeDtypeStruct((1, Cp), jnp.float32),    # per-channel sum
            jax.ShapeDtypeStruct((1, Cp), jnp.float32),    # per-channel sum of squares
        ),
        grid=(n_tiles,),
        in_specs=[
            pl.BlockSpec((tm, Kp), lambda i: (i, 0)),
            pl.BlockSpec((Kp, Cp), lambda i: (0, 0)),
        ],
        out_specs=(
            pl.BlockSpec((tm, Cp), lambda i: (i, 0)),
            pl.BlockSpec((1, Cp), lambda i: (0, 0)),
            pl.BlockSpec((1, Cp), lambda i: (0, 0)),
        ),
        compiler_params=pltpu.CompilerParams(
            dimension_semantics=("arbitrary",),            # stats accumulate across M
            vmem_limit_bytes=VMEM_LIMIT,
        ),
        cost_estimate=pl.CostEstimate(
            flops=flops1, transcendentals=0, bytes_accessed=bytes1),
    )(patches, w_mat)

    # BatchNorm2d, training mode: biased batch statistics over N*H*W per channel,
    # folded into a single per-channel FMA (s, t) computed on tiny (1, Cp) vectors.
    mean = ch_sum / M
    var = jnp.maximum(ch_ssq / M - mean * mean, 0.0)
    gamma_p = jnp.pad(gamma.astype(jnp.float32), (0, Cp - Cout)).reshape(1, Cp)
    beta_p = jnp.pad(beta.astype(jnp.float32), (0, Cp - Cout)).reshape(1, Cp)
    alpha_p = jnp.pad(alpha.astype(jnp.float32), (0, Cp - Cout)).reshape(1, Cp)
    s = gamma_p * jax.lax.rsqrt(var + EPS)
    t = beta_p - mean * s

    bytes2 = 2 * Mp * Cp * 4 + 3 * Cp * 4
    out_flat = pl.pallas_call(
        _bn_prelu_kernel,
        out_shape=jax.ShapeDtypeStruct((Mp, Cp), jnp.float32),
        grid=(n_tiles,),
        in_specs=[
            pl.BlockSpec((tm, Cp), lambda i: (i, 0)),
            pl.BlockSpec((1, Cp), lambda i: (0, 0)),
            pl.BlockSpec((1, Cp), lambda i: (0, 0)),
            pl.BlockSpec((1, Cp), lambda i: (0, 0)),
        ],
        out_specs=pl.BlockSpec((tm, Cp), lambda i: (i, 0)),
        input_output_aliases={0: 0},                       # normalize y in place
        compiler_params=pltpu.CompilerParams(
            dimension_semantics=("parallel",),             # shards across TCs on v7x
            vmem_limit_bytes=VMEM_LIMIT,
        ),
        cost_estimate=pl.CostEstimate(
            flops=3 * Mp * Cp, transcendentals=0, bytes_accessed=bytes2),
    )(y, s, t, alpha_p)

    out = out_flat[:M, :Cout].reshape(N, H, W, Cout)
    # NOTE: a real NHWC pipeline should skip this transpose (it is a full HBM
    # round trip); kept only to honor the PyTorch NCHW contract.
    return out.transpose(0, 3, 1, 2)


def reference(x, weight, gamma, beta, alpha, k):
    """Pure-JAX reference matching the PyTorch module (training-mode BN)."""
    p = k // 2
    x_pad = jnp.pad(x, ((0, 0), (0, 0), (p, p), (p, p)), mode="reflect")
    y = jax.lax.conv_general_dilated(
        x_pad, weight, window_strides=(1, 1), padding="VALID",
        dimension_numbers=("NCHW", "OIHW", "NCHW"))
    mean = y.mean(axis=(0, 2, 3), keepdims=True)
    var = ((y - mean) ** 2).mean(axis=(0, 2, 3), keepdims=True)
    yhat = (y - mean) / jnp.sqrt(var + EPS)
    out = gamma.reshape(1, -1, 1, 1) * yhat + beta.reshape(1, -1, 1, 1)
    return jnp.where(out >= 0, out, alpha.reshape(1, -1, 1, 1) * out)


if __name__ == "__main__":
    # Small shapes consistent with DownConv2D(in_channels=4, out_channels=8, kernel=3)
    N, Cin, H, W = 2, 4, 16, 16
    Cout, k = 8, 3

    key = jax.random.PRNGKey(0)
    kx, kw = jax.random.split(key)
    x = jax.random.normal(kx, (N, Cin, H, W), dtype=jnp.float32)
    weight = 0.1 * jax.random.normal(kw, (Cout, Cin, k, k), dtype=jnp.float32)

    # Deterministic parameter init matching PyTorch defaults:
    gamma = jnp.ones((Cout,), jnp.float32)          # BatchNorm2d weight
    beta = jnp.zeros((Cout,), jnp.float32)          # BatchNorm2d bias
    alpha = jnp.full((Cout,), 0.25, jnp.float32)    # PReLU(out_channels) init

    # tm=128 -> 4 M-tiles: exercises the pipelined grid and the stats accumulator.
    out = down_conv2d(x, weight, gamma, beta, alpha, k=k, tm=128)
    out = jax.block_until_ready(out)

    ref = jax.block_until_ready(reference(x, weight, gamma, beta, alpha, k))
    assert out.shape == (N, Cout, H, W)
    # bf16 MXU operands (f32 accumulate / BN math) -> slightly looser tolerance.
    assert jnp.allclose(out, ref, atol=2e-2, rtol=2e-2), "mismatch vs reference"

    print("KERNEL_OK")
</pallas_src>

<mosaic_0001>
module attributes {stable_mosaic.version = 11 : i64} {
  func.func @_conv_stats_kernel(%arg0: i32, %arg1: memref<128x128xbf16, #tpu.memory_space<vmem>>, %arg2: memref<128x128xbf16, #tpu.memory_space<vmem>>, %arg3: memref<128x128xf32, #tpu.memory_space<vmem>>, %arg4: memref<1x128xf32, #tpu.memory_space<vmem>>, %arg5: memref<1x128xf32, #tpu.memory_space<vmem>>) attributes {dimension_semantics = [#tpu.dimension_semantics<arbitrary>], iteration_bounds = array<i64: 4>, scalar_prefetch = 0 : i64, scratch_operands = 0 : i64, tpu.core_type = #tpu.core_type<tc>, window_params = [{transform_indices = @transform_0, window_bounds = array<i64: 128, 128>}, {pipeline_mode = #tpu.pipeline_mode<synchronous>, transform_indices = @transform_1, window_bounds = array<i64: 128, 128>}, {transform_indices = @transform_2, window_bounds = array<i64: 128, 128>}, {pipeline_mode = #tpu.pipeline_mode<synchronous>, transform_indices = @transform_3, window_bounds = array<i64: 1, 128>}, {pipeline_mode = #tpu.pipeline_mode<synchronous>, transform_indices = @transform_4, window_bounds = array<i64: 1, 128>}]} {
    %c0_i32 = arith.constant 0 : i32
    %0 = arith.cmpi eq, %arg0, %c0_i32 : i32
    %1 = arith.extui %0 : i1 to i32
    %c0_i32_0 = arith.constant 0 : i32
    %2 = arith.cmpi ne, %1, %c0_i32_0 : i32
    scf.if %2 {
      %cst_16 = arith.constant 0.000000e+00 : f32
      %18 = vector.broadcast %cst_16 : f32 to vector<1x128xf32>
      %c0_17 = arith.constant 0 : index
      %c0_18 = arith.constant 0 : index
      %19 = vector.load %arg4[%c0_17, %c0_18] : memref<1x128xf32, #tpu.memory_space<vmem>>, vector<1x128xf32>
      tpu.vector_store %arg4[%c0_17, %c0_18], %18 {strides = array<i32>} : memref<1x128xf32, #tpu.memory_space<vmem>>, vector<1x128xf32>,
      %cst_19 = arith.constant 0.000000e+00 : f32
      %20 = vector.broadcast %cst_19 : f32 to vector<1x128xf32>
      %c0_20 = arith.constant 0 : index
      %c0_21 = arith.constant 0 : index
      %21 = vector.load %arg5[%c0_20, %c0_21] : memref<1x128xf32, #tpu.memory_space<vmem>>, vector<1x128xf32>
      tpu.vector_store %arg5[%c0_20, %c0_21], %20 {strides = array<i32>} : memref<1x128xf32, #tpu.memory_space<vmem>>, vector<1x128xf32>,
    } else {
    }
    %c0 = arith.constant 0 : index
    %c0_1 = arith.constant 0 : index
    %3 = vector.load %arg1[%c0, %c0_1] : memref<128x128xbf16, #tpu.memory_space<vmem>>, vector<128x128xbf16>
    %c0_2 = arith.constant 0 : index
    %c0_3 = arith.constant 0 : index
    %4 = vector.load %arg2[%c0_2, %c0_3] : memref<128x128xbf16, #tpu.memory_space<vmem>>, vector<128x128xbf16>
    %cst = arith.constant dense<0.000000e+00> : vector<128x128xf32>
    %5 = tpu.matmul %3, %4, %cst {dimension_numbers = #tpu.dot_dimension_numbers<[1], [0], [0], [1], [0, 0, 1, 1], [], []>} : vector<128x128xbf16>, vector<128x128xbf16>, vector<128x128xf32> -> vector<128x128xf32>
    %c0_4 = arith.constant 0 : index
    %c0_5 = arith.constant 0 : index
    %6 = vector.load %arg3[%c0_4, %c0_5] : memref<128x128xf32, #tpu.memory_space<vmem>>, vector<128x128xf32>
    tpu.vector_store %arg3[%c0_4, %c0_5], %5 {strides = array<i32>} : memref<128x128xf32, #tpu.memory_space<vmem>>, vector<128x128xf32>,
    %c0_6 = arith.constant 0 : index
    %c0_7 = arith.constant 0 : index
    %7 = vector.load %arg4[%c0_6, %c0_7] : memref<1x128xf32, #tpu.memory_space<vmem>>, vector<1x128xf32>
    %cst_8 = arith.constant dense<0.000000e+00> : vector<128xf32>
    %8 = vector.multi_reduction <add>, %5, %cst_8 [0] : vector<128x128xf32> to vector<128xf32>
    %9 = vector.shape_cast %8 : vector<128xf32> to vector<1x128xf32>
    %10 = arith.addf %7, %9 : vector<1x128xf32>
    %c0_9 = arith.constant 0 : index
    %c0_10 = arith.constant 0 : index
    %11 = vector.load %arg4[%c0_9, %c0_10] : memref<1x128xf32, #tpu.memory_space<vmem>>, vector<1x128xf32>
    tpu.vector_store %arg4[%c0_9, %c0_10], %10 {strides = array<i32>} : memref<1x128xf32, #tpu.memory_space<vmem>>, vector<1x128xf32>,
    %c0_11 = arith.constant 0 : index
    %c0_12 = arith.constant 0 : index
    %12 = vector.load %arg5[%c0_11, %c0_12] : memref<1x128xf32, #tpu.memory_space<vmem>>, vector<1x128xf32>
    %13 = arith.mulf %5, %5 : vector<128x128xf32>
    %cst_13 = arith.constant dense<0.000000e+00> : vector<128xf32>
    %14 = vector.multi_reduction <add>, %13, %cst_13 [0] : vector<128x128xf32> to vector<128xf32>
    %15 = vector.shape_cast %14 : vector<128xf32> to vector<1x128xf32>
    %16 = arith.addf %12, %15 : vector<1x128xf32>
    %c0_14 = arith.constant 0 : index
    %c0_15 = arith.constant 0 : index
    %17 = vector.load %arg5[%c0_14, %c0_15] : memref<1x128xf32, #tpu.memory_space<vmem>>, vector<1x128xf32>
    tpu.vector_store %arg5[%c0_14, %c0_15], %16 {strides = array<i32>} : memref<1x128xf32, #tpu.memory_space<vmem>>, vector<1x128xf32>,
    return
  }
  func.func @transform_0(%arg0: i32) -> (i32, i32) {
    %c0_i32 = arith.constant 0 : i32
    %c0_i32_0 = arith.constant 0 : i32
    return %arg0, %c0_i32 : i32, i32
  }
  func.func @transform_1(%arg0: i32) -> (i32, i32) {
    %c0_i32 = arith.constant 0 : i32
    %c0_i32_0 = arith.constant 0 : i32
    %c0_i32_1 = arith.constant 0 : i32
    return %c0_i32, %c0_i32_0 : i32, i32
  }
  func.func @transform_2(%arg0: i32) -> (i32, i32) {
    %c0_i32 = arith.constant 0 : i32
    %c0_i32_0 = arith.constant 0 : i32
    return %arg0, %c0_i32 : i32, i32
  }
  func.func @transform_3(%arg0: i32) -> (i32, i32) {
    %c0_i32 = arith.constant 0 : i32
    %c0_i32_0 = arith.constant 0 : i32
    %c0_i32_1 = arith.constant 0 : i32
    return %c0_i32, %c0_i32_0 : i32, i32
  }
  func.func @transform_4(%arg0: i32) -> (i32, i32) {
    %c0_i32 = arith.constant 0 : i32
    %c0_i32_0 = arith.constant 0 : i32
    %c0_i32_1 = arith.constant 0 : i32
    return %c0_i32, %c0_i32_0 : i32, i32
  }
}

module attributes {stable_mosaic.version = 11 : i64} {
  func.func @_bn_prelu_kernel(%arg0: i32, %arg1: memref<128x128xf32, #tpu.memory_space<vmem>>, %arg2: memref<1x128xf32, #tpu.memory_space<vmem>>, %arg3: memref<1x128xf32, #tpu.memory_space<vmem>>, %arg4: memref<1x128xf32, #tpu.memory_space<vmem>>, %arg5: memref<128x128xf32, #tpu.memory_space<vmem>>) attributes {dimension_semantics = [#tpu.dimension_semantics<parallel>], iteration_bounds = array<i64: 4>, scalar_prefetch = 0 : i64, scratch_operands = 0 : i64, tpu.core_type = #tpu.core_type<tc>, window_params = [{transform_indices = @transform_0, window_bounds = array<i64: 128, 128>}, {pipeline_mode = #tpu.pipeline_mode<synchronous>, transform_indices = @transform_1, window_bounds = array<i64: 1, 128>}, {pipeline_mode = #tpu.pipeline_mode<synchronous>, transform_indices = @transform_2, window_bounds = array<i64: 1, 128>}, {pipeline_mode = #tpu.pipeline_mode<synchronous>, transform_indices = @transform_3, window_bounds = array<i64: 1, 128>}, {transform_indices = @transform_4, window_bounds = array<i64: 128, 128>}]} {
    %c0 = arith.constant 0 : index
    %c0_0 = arith.constant 0 : index
    %0 = vector.load %arg1[%c0, %c0_0] : memref<128x128xf32, #tpu.memory_space<vmem>>, vector<128x128xf32>
    %c0_1 = arith.constant 0 : index
    %c0_2 = arith.constant 0 : index
    %1 = vector.load %arg2[%c0_1, %c0_2] : memref<1x128xf32, #tpu.memory_space<vmem>>, vector<1x128xf32>
    %2 = vector.broadcast %1 : vector<1x128xf32> to vector<128x128xf32>
    %3 = arith.mulf %0, %2 : vector<128x128xf32>
    %c0_3 = arith.constant 0 : index
    %c0_4 = arith.constant 0 : index
    %4 = vector.load %arg3[%c0_3, %c0_4] : memref<1x128xf32, #tpu.memory_space<vmem>>, vector<1x128xf32>
    %5 = vector.broadcast %4 : vector<1x128xf32> to vector<128x128xf32>
    %6 = arith.addf %3, %5 : vector<128x128xf32>
    %cst = arith.constant 0.000000e+00 : f32
    %7 = vector.broadcast %cst : f32 to vector<128x128xf32>
    %8 = arith.cmpf oge, %6, %7 : vector<128x128xf32>
    %c0_5 = arith.constant 0 : index
    %c0_6 = arith.constant 0 : index
    %9 = vector.load %arg4[%c0_5, %c0_6] : memref<1x128xf32, #tpu.memory_space<vmem>>, vector<1x128xf32>
    %10 = vector.broadcast %9 : vector<1x128xf32> to vector<128x128xf32>
    %11 = arith.mulf %10, %6 : vector<128x128xf32>
    %12 = arith.select %8, %6, %11 : vector<128x128xi1>, vector<128x128xf32>
    %c0_7 = arith.constant 0 : index
    %c0_8 = arith.constant 0 : index
    %13 = vector.load %arg5[%c0_7, %c0_8] : memref<128x128xf32, #tpu.memory_space<vmem>>, vector<128x128xf32>
    tpu.vector_store %arg5[%c0_7, %c0_8], %12 {strides = array<i32>} : memref<128x128xf32, #tpu.memory_space<vmem>>, vector<128x128xf32>,
    return
  }
  func.func @transform_0(%arg0: i32) -> (i32, i32) {
    %c0_i32 = arith.constant 0 : i32
    %c0_i32_0 = arith.constant 0 : i32
    return %arg0, %c0_i32 : i32, i32
  }
  func.func @transform_1(%arg0: i32) -> (i32, i32) {
    %c0_i32 = arith.constant 0 : i32
    %c0_i32_0 = arith.constant 0 : i32
    %c0_i32_1 = arith.constant 0 : i32
    return %c0_i32, %c0_i32_0 : i32, i32
  }
  func.func @transform_2(%arg0: i32) -> (i32, i32) {
    %c0_i32 = arith.constant 0 : i32
    %c0_i32_0 = arith.constant 0 : i32
    %c0_i32_1 = arith.constant 0 : i32
    return %c0_i32, %c0_i32_0 : i32, i32
  }
  func.func @transform_3(%arg0: i32) -> (i32, i32) {
    %c0_i32 = arith.constant 0 : i32
    %c0_i32_0 = arith.constant 0 : i32
    %c0_i32_1 = arith.constant 0 : i32
    return %c0_i32, %c0_i32_0 : i32, i32
  }
  func.func @transform_4(%arg0: i32) -> (i32, i32) {
    %c0_i32 = arith.constant 0 : i32
    %c0_i32_0 = arith.constant 0 : i32
    return %arg0, %c0_i32 : i32, i32
  }
}

</mosaic_0001>

<llo_original>
// kernel: down_conv2d.3
$region0: #{down_conv2d.3}
  #allocation0 [shape = 'u32[]', space=smem, size = 0x4, offset = 0x4, fixed_abs, tag = 'smem constant byte address 0x4 - core index']
  #allocation1 [shape = 'u32[144,128]{1,0:T(1,128)}', space=vmem, size = 0x12000, scoped, tag = 'internal scratch']
  %s0 = inlined_call_operand.vmem [shape: f32[512,128], index: 0, kind: input, shape index: {}, may-alias: {0,4}]
  %s1 = inlined_call_operand.vmem [shape: f32[1,128], index: 1, kind: input, shape index: {}]
  %s2 = inlined_call_operand.vmem [shape: f32[1,128], index: 2, kind: input, shape index: {}]
  %s3 = inlined_call_operand.vmem [shape: f32[1,128], index: 3, kind: input, shape index: {}]
  %s4 = inlined_call_operand.vmem [shape: f32[512,128], index: 4, kind: output, shape index: {}, may-alias: {0,4}]
  %s5 = sld [smem:[#allocation0]]
  $region49: #{down_conv2d.3} parent=0
    _
  %s7 = ssub.s32 1, %s5
  %s8 = scalar_select 0, %s7, %s5
  loop: start=0, step=1, limit=6
  $region2: #{down_conv2d.3} parent=0 // loop_pre_header
    _
  $region3: #{down_conv2d.3} parent=0 // loop_header
    %s10 = sphi 0, %s14
    %p11 = scmp.ge.s32.totalorder %s10, 6
    %s20 = sphi 0, %s22
    %s23 = sphi 0, %s20
    %s24 = sphi 0, %s23
    %s40 = sphi 0, %s24
    %s44 = sphi 0, %s44
    %s46 = sphi 0, %s44
    %s47 = sphi 0, %s46
    %s61 = sphi 0, %s47
    %s65 = sphi 0, %s65
    %s67 = sphi 0, %s65
    %s68 = sphi 0, %s67
    %s82 = sphi 0, %s68
    %s86 = sphi 0, %s86
    %s88 = sphi 0, %s86
    %s89 = sphi 0, %s88
    %s103 = sphi 0, %s89
    %s109 = sphi 0, %s111
    %s112 = sphi 0, %s109
    %s113 = sphi 0, %s112
    %s129 = sphi 0, %s113
  $region4: #{down_conv2d.3} parent=0 // loop_header_branch
    %13 = sbr.rel (%p11) target = $region8
  $region5: #{down_conv2d.3} parent=0 // loop_body
    %s15 = ssub.s32 %s10, 1
    %s16 = ssub.s32 %s10, 2
    %s17 = sadd.s32 %s10, 1
    %s18 = ssub.s32 %s10, %s17
    %p19 = scmp.eq.s32.totalorder %s18, 0
    %s21 = sadd.s32 %s20, 1
    %s22 = scalar_select %p19, %s20, %s21
    %p25 = pneg %p19
    %p26 = scmp.eq.s32.totalorder %s10, 3
    %p27 = por %p25, %p26
    %p28 = scmp.ne.s32.totalorder %s20, %s23
    %p29 = scmp.eq.s32.totalorder %s10, 0
    %p30 = por %p28, %p29
    %p31 = scmp.ne.s32.totalorder %s20, %s23
    %p32 = scmp.eq.s32.totalorder %s15, 3
    %p33 = por %p31, %p32
    %p34 = scmp.ne.s32.totalorder %s23, %s24
    %p35 = scmp.eq.s32.totalorder %s15, 0
    %p36 = por %p34, %p35
    %p37 = scmp.ne.s32.totalorder %s23, %s24
    %p38 = scmp.eq.s32.totalorder %s16, 3
    %p39 = por %p37, %p38
    %p41 = scmp.ne.s32.totalorder %s24, %s40
    %p42 = scmp.eq.s32.totalorder %s16, 0
    %p43 = por %p41, %p42
    %s45 = sadd.s32 %s44, 1
    %p48 = scmp.eq.s32.totalorder %s10, 3
    %p49 = scmp.ne.s32.totalorder %s44, %s46
    %p50 = scmp.eq.s32.totalorder %s10, 0
    %p51 = por %p49, %p50
    %p52 = scmp.ne.s32.totalorder %s44, %s46
    %p53 = scmp.eq.s32.totalorder %s15, 3
    %p54 = por %p52, %p53
    %p55 = scmp.ne.s32.totalorder %s46, %s47
    %p56 = scmp.eq.s32.totalorder %s15, 0
    %p57 = por %p55, %p56
    %p58 = scmp.ne.s32.totalorder %s46, %s47
    %p59 = scmp.eq.s32.totalorder %s16, 3
    %p60 = por %p58, %p59
    %p62 = scmp.ne.s32.totalorder %s47, %s61
    %p63 = scmp.eq.s32.totalorder %s16, 0
    %p64 = por %p62, %p63
    %s66 = sadd.s32 %s65, 1
    %p69 = scmp.eq.s32.totalorder %s10, 3
    %p70 = scmp.ne.s32.totalorder %s65, %s67
    %p71 = scmp.eq.s32.totalorder %s10, 0
    %p72 = por %p70, %p71
    %p73 = scmp.ne.s32.totalorder %s65, %s67
    %p74 = scmp.eq.s32.totalorder %s15, 3
    %p75 = por %p73, %p74
    %p76 = scmp.ne.s32.totalorder %s67, %s68
    %p77 = scmp.eq.s32.totalorder %s15, 0
    %p78 = por %p76, %p77
    %p79 = scmp.ne.s32.totalorder %s67, %s68
    %p80 = scmp.eq.s32.totalorder %s16, 3
    %p81 = por %p79, %p80
    %p83 = scmp.ne.s32.totalorder %s68, %s82
    %p84 = scmp.eq.s32.totalorder %s16, 0
    %p85 = por %p83, %p84
    %s87 = sadd.s32 %s86, 1
    %p90 = scmp.eq.s32.totalorder %s10, 3
    %p91 = scmp.ne.s32.totalorder %s86, %s88
    %p92 = scmp.eq.s32.totalorder %s10, 0
    %p93 = por %p91, %p92
    %p94 = scmp.ne.s32.totalorder %s86, %s88
    %p95 = scmp.eq.s32.totalorder %s15, 3
    %p96 = por %p94, %p95
    %p97 = scmp.ne.s32.totalorder %s88, %s89
    %p98 = scmp.eq.s32.totalorder %s15, 0
    %p99 = por %p97, %p98
    %p100 = scmp.ne.s32.totalorder %s88, %s89
    %p101 = scmp.eq.s32.totalorder %s16, 3
    %p102 = por %p100, %p101
    %p104 = scmp.ne.s32.totalorder %s89, %s103
    %p105 = scmp.eq.s32.totalorder %s16, 0
    %p106 = por %p104, %p105
    %s107 = ssub.s32 %s10, %s17
    %p108 = scmp.eq.s32.totalorder %s107, 0
    %s110 = sadd.s32 %s109, 1
    %s111 = scalar_select %p108, %s109, %s110
    %p114 = pneg %p108
    %p115 = scmp.eq.s32.totalorder %s10, 3
    %p116 = por %p114, %p115
    %p117 = scmp.ne.s32.totalorder %s109, %s112
    %p118 = scmp.eq.s32.totalorder %s10, 0
    %p119 = por %p117, %p118
    %p120 = scmp.ne.s32.totalorder %s109, %s112
    %p121 = scmp.eq.s32.totalorder %s15, 3
    %p122 = por %p120, %p121
    %p123 = scmp.ne.s32.totalorder %s112, %s113
    %p124 = scmp.eq.s32.totalorder %s15, 0
    %p125 = por %p123, %p124
    %p126 = scmp.ne.s32.totalorder %s112, %s113
    %p127 = scmp.eq.s32.totalorder %s16, 3
    %p128 = por %p126, %p127
    %p130 = scmp.ne.s32.totalorder %s113, %s129
    %p131 = scmp.eq.s32.totalorder %s16, 0
    %p132 = por %p130, %p131
    %p133 = scmp.le.s32.totalorder 1, %s10
    %p134 = scmp.lt.s32.totalorder %s10, 5
    %p135 = pnand %p133, %p134
    %p136 = pneg %p135
    // Predicated region
    $region9: #{down_conv2d.3} parent=5 // pred_check
      _
    $region10: #{down_conv2d.3} parent=5 // pred_check_branch
      %138 = sbr.rel (%p135) target = $region12
    $region11: #{down_conv2d.3} parent=5 // pred_region
      %s139 = ssub.s32 %s10, 1
      // Predicated region
      $region13: #{down_conv2d.3} parent=11 // pred_check
        %p140 = pneg %p57
      $region14: #{down_conv2d.3} parent=11 // pred_check_branch
        %142 = sbr.rel (%p140) target = $region16
      $region15: #{down_conv2d.3} parent=11 // pred_region
        _
      $region16: #{down_conv2d.3} parent=11 // pred_fallthru
        _
      // Predicated region
      $region17: #{down_conv2d.3} parent=11 // pred_check
        %p143 = pneg %p78
      $region18: #{down_conv2d.3} parent=11 // pred_check_branch
        %145 = sbr.rel (%p143) target = $region20
      $region19: #{down_conv2d.3} parent=11 // pred_region
        _
      $region20: #{down_conv2d.3} parent=11 // pred_fallthru
        _
      // Predicated region
      $region21: #{down_conv2d.3} parent=11 // pred_check
        %p146 = pneg %p99
      $region22: #{down_conv2d.3} parent=11 // pred_check_branch
        %148 = sbr.rel (%p146) target = $region24
      $region23: #{down_conv2d.3} parent=11 // pred_region
        _
      $region24: #{down_conv2d.3} parent=11 // pred_fallthru
        _
    $region12: #{down_conv2d.3} parent=5 // pred_fallthru
      _
    %p149 = scmp.lt.s32.totalorder %s10, 4
    // Predicated region
    $region25: #{down_conv2d.3} parent=5 // pred_check
      %p150 = pneg %p149
    $region26: #{down_conv2d.3} parent=5 // pred_check_branch
      %152 = sbr.rel (%p150) target = $region28
    $region27: #{down_conv2d.3} parent=5 // pred_region
      // Predicated region
      $region29: #{down_conv2d.3} parent=27 // pred_check
        %p153 = pneg %p30
      $region30: #{down_conv2d.3} parent=27 // pred_check_branch
        %155 = sbr.rel (%p153) target = $region32
      $region31: #{down_conv2d.3} parent=27 // pred_region
        %s156 = smul.u32 16, %s10
        %p157 = scmp.lt.s32.totalorder %s156, 63
        %s158 = scalar_select %p157, %s156, 63
        %s159 = smul.addr %s158, 8
        %s160 = scalar_lea.vmem %s0, %s159
        %s161 = smul.u32 16, %s10
      $region32: #{down_conv2d.3} parent=27 // pred_fallthru
        _
    $region28: #{down_conv2d.3} parent=5 // pred_fallthru
      _
    %p162 = scmp.le.s32.totalorder 1, %s10
    %p163 = scmp.lt.s32.totalorder %s10, 5
    %p164 = pnand %p162, %p163
    %p165 = pneg %p164
    // Predicated region
    $region33: #{down_conv2d.3} parent=5 // pred_check
      _
    $region34: #{down_conv2d.3} parent=5 // pred_check_branch
      %167 = sbr.rel (%p164) target = $region36
    $region35: #{down_conv2d.3} parent=5 // pred_region
      %s168 = ssub.s32 %s10, 1
      %s169 = smul.u32 16, %s15
      %p170 = scmp.lt.s32.totalorder %s169, 63
      %s171 = scalar_select %p170, %s169, 63
      %s172 = smul.addr %s171, 8
      %s173 = scalar_lea.vmem %s0, %s172
      %p174 = pneg %p36
      %p175 = pneg %p33
      %p176 = pneg %p57
      %p177 = pneg %p54
      %p178 = pneg %p78
      %p179 = pneg %p75
      %p180 = pneg %p99
      %p181 = pneg %p96
      %p182 = pneg %p125
      %p183 = pneg %p122
      %s184 = smul.u32 16, %s15
      %p185 = scmp.lt.s32.totalorder %s184, 63
      %s186 = scalar_select %p185, %s184, 63
      %s187 = smul.addr %s186, 8
      %s188 = scalar_lea.vmem %s4, %s187
      %s189 = smul.u32 16, %s15
      %p190 = scmp.lt.s32.totalorder %s189, 63
      %s191 = scalar_select %p190, %s189, 63
      %s192 = smul.addr %s191, 8
      %s193 = scalar_lea.vmem %s0, %s192
      %s194 = smul.u32 16, %s15
      %s195 = smul.u32 16, %s15
      %p196 = scmp.lt.s32.totalorder %s195, 63
      %s197 = scalar_select %p196, %s195, 63
      %s198 = smul.addr %s197, 8
      %s199 = scalar_lea.vmem %s4, %s198
      %s200 = smul.u32 16, %s15
      %v201 = vld [vmem:[%s193] sm:$0xff]
      %v202 = vld [vmem:[%s193 + $0x8] sm:$0xff]
      %v203 = vld [vmem:[%s193 + $0x10] sm:$0xff]
      %v204 = vld [vmem:[%s193 + $0x18] sm:$0xff]
      %v205 = vld [vmem:[%s193 + $0x20] sm:$0xff]
      %v206 = vld [vmem:[%s193 + $0x28] sm:$0xff]
      %v207 = vld [vmem:[%s193 + $0x30] sm:$0xff]
      %v208 = vld [vmem:[%s193 + $0x38] sm:$0xff]
      %v209 = vld [vmem:[%s193 + $0x40] sm:$0xff]
      %v210 = vld [vmem:[%s193 + $0x48] sm:$0xff]
      %v211 = vld [vmem:[%s193 + $0x50] sm:$0xff]
      %v212 = vld [vmem:[%s193 + $0x58] sm:$0xff]
      %v213 = vld [vmem:[%s193 + $0x60] sm:$0xff]
      %v214 = vld [vmem:[%s193 + $0x68] sm:$0xff]
      %v215 = vld [vmem:[%s193 + $0x70] sm:$0xff]
      %v216 = vld [vmem:[%s193 + $0x78] sm:$0xff]
      %v217 = vld [vmem:[%s1] sm:$0x1]
      %v219 = vlaneseq
      %v220 = vshrl.u32 %v219, 7
      %v221 = vsub.s32 0, %v220
      %v222 = vrot.slane %v217, %v221
      %v224 = vmul.f32 %v201, %v222
      %v225 = vmul.f32 %v202, %v222
      %v226 = vmul.f32 %v203, %v222
      %v227 = vmul.f32 %v204, %v222
      %v228 = vmul.f32 %v205, %v222
      %v229 = vmul.f32 %v206, %v222
      %v230 = vmul.f32 %v207, %v222
      %v231 = vmul.f32 %v208, %v222
      %v232 = vmul.f32 %v209, %v222
      %v233 = vmul.f32 %v210, %v222
      %v234 = vmul.f32 %v211, %v222
      %v235 = vmul.f32 %v212, %v222
      %v236 = vmul.f32 %v213, %v222
      %v237 = vmul.f32 %v214, %v222
      %v238 = vmul.f32 %v215, %v222
      %v239 = vmul.f32 %v216, %v222
      %v240 = vld [vmem:[%s2] sm:$0x1]
      %v242 = vlaneseq
      %v243 = vshrl.u32 %v242, 7
      %v244 = vsub.s32 0, %v243
      %v245 = vrot.slane %v240, %v244
      %v247 = vadd.f32 %v224, %v245
      %v248 = vadd.f32 %v225, %v245
      %v249 = vadd.f32 %v226, %v245
      %v250 = vadd.f32 %v227, %v245
      %v251 = vadd.f32 %v228, %v245
      %v252 = vadd.f32 %v229, %v245
      %v253 = vadd.f32 %v230, %v245
      %v254 = vadd.f32 %v231, %v245
      %v255 = vadd.f32 %v232, %v245
      %v256 = vadd.f32 %v233, %v245
      %v257 = vadd.f32 %v234, %v245
      %v258 = vadd.f32 %v235, %v245
      %v259 = vadd.f32 %v236, %v245
      %v260 = vadd.f32 %v237, %v245
      %v261 = vadd.f32 %v238, %v245
      %v262 = vadd.f32 %v239, %v245
      %vm263 = vcmp.ge.f32.partialorder %v247, 0.0
      %vm264 = vcmp.ge.f32.partialorder %v248, 0.0
      %vm265 = vcmp.ge.f32.partialorder %v249, 0.0
      %vm266 = vcmp.ge.f32.partialorder %v250, 0.0
      %vm267 = vcmp.ge.f32.partialorder %v251, 0.0
      %vm268 = vcmp.ge.f32.partialorder %v252, 0.0
      %vm269 = vcmp.ge.f32.partialorder %v253, 0.0
      %vm270 = vcmp.ge.f32.partialorder %v254, 0.0
      %vm271 = vcmp.ge.f32.partialorder %v255, 0.0
      %vm272 = vcmp.ge.f32.partialorder %v256, 0.0
      %vm273 = vcmp.ge.f32.partialorder %v257, 0.0
      %vm274 = vcmp.ge.f32.partialorder %v258, 0.0
      %vm275 = vcmp.ge.f32.partialorder %v259, 0.0
      %vm276 = vcmp.ge.f32.partialorder %v260, 0.0
      %vm277 = vcmp.ge.f32.partialorder %v261, 0.0
      %vm278 = vcmp.ge.f32.partialorder %v262, 0.0
      %v279 = vld [vmem:[%s3] sm:$0x1]
      %v281 = vlaneseq
      %v282 = vshrl.u32 %v281, 7
      %v283 = vsub.s32 0, %v282
      %v284 = vrot.slane %v279, %v283
      %v286 = vmul.f32 %v284, %v247
      %v287 = vmul.f32 %v284, %v248
      %v288 = vmul.f32 %v284, %v249
      %v289 = vmul.f32 %v284, %v250
      %v290 = vmul.f32 %v284, %v251
      %v291 = vmul.f32 %v284, %v252
      %v292 = vmul.f32 %v284, %v253
      %v293 = vmul.f32 %v284, %v254
      %v294 = vmul.f32 %v284, %v255
      %v295 = vmul.f32 %v284, %v256
      %v296 = vmul.f32 %v284, %v257
      %v297 = vmul.f32 %v284, %v258
      %v298 = vmul.f32 %v284, %v259
      %v299 = vmul.f32 %v284, %v260
      %v300 = vmul.f32 %v284, %v261
      %v301 = vmul.f32 %v284, %v262
      %v302 = vsel %vm263, %v247, %v286
      %v303 = vsel %vm264, %v248, %v287
      %v304 = vsel %vm265, %v249, %v288
      %v305 = vsel %vm266, %v250, %v289
      %v306 = vsel %vm267, %v251, %v290
      %v307 = vsel %vm268, %v252, %v291
      %v308 = vsel %vm269, %v253, %v292
      %v309 = vsel %vm270, %v254, %v293
      %v310 = vsel %vm271, %v255, %v294
      %v311 = vsel %vm272, %v256, %v295
      %v312 = vsel %vm273, %v257, %v296
      %v313 = vsel %vm274, %v258, %v297
      %v314 = vsel %vm275, %v259, %v298
      %v315 = vsel %vm276, %v260, %v299
      %v316 = vsel %vm277, %v261, %v300
      %v317 = vsel %vm278, %v262, %v301
      %318 = vst [vmem:[%s199] sm:$0xff] %v302
      %319 = vst [vmem:[%s199 + $0x8] sm:$0xff] %v303
      %320 = vst [vmem:[%s199 + $0x10] sm:$0xff] %v304
      %321 = vst [vmem:[%s199 + $0x18] sm:$0xff] %v305
      %322 = vst [vmem:[%s199 + $0x20] sm:$0xff] %v306
      %323 = vst [vmem:[%s199 + $0x28] sm:$0xff] %v307
      %324 = vst [vmem:[%s199 + $0x30] sm:$0xff] %v308
      %325 = vst [vmem:[%s199 + $0x38] sm:$0xff] %v309
      %326 = vst [vmem:[%s199 + $0x40] sm:$0xff] %v310
      %327 = vst [vmem:[%s199 + $0x48] sm:$0xff] %v311
      %328 = vst [vmem:[%s199 + $0x50] sm:$0xff] %v312
      %329 = vst [vmem:[%s199 + $0x58] sm:$0xff] %v313
      %330 = vst [vmem:[%s199 + $0x60] sm:$0xff] %v314
      %331 = vst [vmem:[%s199 + $0x68] sm:$0xff] %v315
      %332 = vst [vmem:[%s199 + $0x70] sm:$0xff] %v316
      %333 = vst [vmem:[%s199 + $0x78] sm:$0xff] %v317
      %s334 = smul.u32 16, %s15
      %p335 = scmp.lt.s32.totalorder %s334, 63
      %s336 = scalar_select %p335, %s334, 63
      %s337 = smul.addr %s336, 8
      %s338 = scalar_lea.vmem %s4, %s337
      // Predicated region
      $region37: #{down_conv2d.3} parent=35 // pred_check
        %p339 = pneg %p122
      $region38: #{down_conv2d.3} parent=35 // pred_check_branch
        %341 = sbr.rel (%p339) target = $region40
      $region39: #{down_conv2d.3} parent=35 // pred_region
        %s342 = smul.u32 16, %s15
      $region40: #{down_conv2d.3} parent=35 // pred_fallthru
        _
    $region36: #{down_conv2d.3} parent=5 // pred_fallthru
      _
    %p343 = scmp.le.s32.totalorder 2, %s10
    // Predicated region
    $region41: #{down_conv2d.3} parent=5 // pred_check
      %p344 = pneg %p343
    $region42: #{down_conv2d.3} parent=5 // pred_check_branch
      %346 = sbr.rel (%p344) target = $region44
    $region43: #{down_conv2d.3} parent=5 // pred_region
      %s347 = ssub.s32 %s10, 2
      // Predicated region
      $region45: #{down_conv2d.3} parent=43 // pred_check
        %p348 = pneg %p128
      $region46: #{down_conv2d.3} parent=43 // pred_check_branch
        %350 = sbr.rel (%p348) target = $region48
      $region47: #{down_conv2d.3} parent=43 // pred_region
        %s351 = smul.u32 16, %s16
        %p352 = scmp.lt.s32.totalorder %s351, 63
        %s353 = scalar_select %p352, %s351, 63
        %s354 = smul.addr %s353, 8
        %s355 = scalar_lea.vmem %s4, %s354
      $region48: #{down_conv2d.3} parent=43 // pred_fallthru
        _
    $region44: #{down_conv2d.3} parent=5 // pred_fallthru
      _
  $region6: #{down_conv2d.3} parent=0 // loop_footer
    %s14 = sadd.s32 1, %s10
  $region7: #{down_conv2d.3} parent=0 // loop_footer_branch
    %9 = sbr.rel target = $region3
  $region8: #{down_conv2d.3} parent=0 // loop_exit
    _

// kernel: down_conv2d.2
$region0: #{down_conv2d.2}
  #allocation0 [shape = 'u32[]', space=smem, size = 0x4, offset = 0x4, fixed_abs, tag = 'smem constant byte address 0x4 - core index']
  #allocation1 [shape = 'u32[144,128]{1,0:T(1,128)}', space=vmem, size = 0x12000, scoped, tag = 'internal scratch']
  %s0 = inlined_call_operand.vmem [shape: bf16[512,128], index: 0, kind: input, shape index: {}]
  %s1 = inlined_call_operand.vmem [shape: bf16[128,128], index: 1, kind: input, shape index: {}]
  %s2 = inlined_call_operand.vmem [shape: f32[512,128], index: 2, kind: output, shape index: {0}]
  %s3 = inlined_call_operand.vmem [shape: f32[1,128], index: 3, kind: output, shape index: {1}]
  %s4 = inlined_call_operand.vmem [shape: f32[1,128], index: 4, kind: output, shape index: {2}]
  %5 = xla_tuple %s2, %s3, %s4
  %s6 = sld [smem:[#allocation0]]
  $region61: #{down_conv2d.2} parent=0
    _
  %s8 = ssub.s32 1, %s6
  %s9 = scalar_select 0, %s8, %s6
  loop: start=0, step=1, limit=6
  $region2: #{down_conv2d.2} parent=0 // loop_pre_header
    _
  $region3: #{down_conv2d.2} parent=0 // loop_header
    %s11 = sphi 0, %s15
    %p12 = scmp.ge.s32.totalorder %s11, 6
    %s21 = sphi 0, %s23
    %s24 = sphi 0, %s21
    %s25 = sphi 0, %s24
    %s41 = sphi 0, %s25
    %s45 = sphi 0, %s45
    %s47 = sphi 0, %s45
    %s48 = sphi 0, %s47
    %s62 = sphi 0, %s48
    %s68 = sphi 0, %s70
    %s71 = sphi 0, %s68
    %s72 = sphi 0, %s71
    %s88 = sphi 0, %s72
    %s92 = sphi 0, %s92
    %s94 = sphi 0, %s92
    %s95 = sphi 0, %s94
    %s109 = sphi 0, %s95
    %s113 = sphi 0, %s113
    %s115 = sphi 0, %s113
    %s116 = sphi 0, %s115
    %s130 = sphi 0, %s116
  $region4: #{down_conv2d.2} parent=0 // loop_header_branch
    %14 = sbr.rel (%p12) target = $region8
  $region5: #{down_conv2d.2} parent=0 // loop_body
    %s16 = ssub.s32 %s11, 1
    %s17 = ssub.s32 %s11, 2
    %s18 = sadd.s32 %s11, 1
    %s19 = ssub.s32 %s11, %s18
    %p20 = scmp.eq.s32.totalorder %s19, 0
    %s22 = sadd.s32 %s21, 1
    %s23 = scalar_select %p20, %s21, %s22
    %p26 = pneg %p20
    %p27 = scmp.eq.s32.totalorder %s11, 3
    %p28 = por %p26, %p27
    %p29 = scmp.ne.s32.totalorder %s21, %s24
    %p30 = scmp.eq.s32.totalorder %s11, 0
    %p31 = por %p29, %p30
    %p32 = scmp.ne.s32.totalorder %s21, %s24
    %p33 = scmp.eq.s32.totalorder %s16, 3
    %p34 = por %p32, %p33
    %p35 = scmp.ne.s32.totalorder %s24, %s25
    %p36 = scmp.eq.s32.totalorder %s16, 0
    %p37 = por %p35, %p36
    %p38 = scmp.ne.s32.totalorder %s24, %s25
    %p39 = scmp.eq.s32.totalorder %s17, 3
    %p40 = por %p38, %p39
    %p42 = scmp.ne.s32.totalorder %s25, %s41
    %p43 = scmp.eq.s32.totalorder %s17, 0
    %p44 = por %p42, %p43
    %s46 = sadd.s32 %s45, 1
    %p49 = scmp.eq.s32.totalorder %s11, 3
    %p50 = scmp.ne.s32.totalorder %s45, %s47
    %p51 = scmp.eq.s32.totalorder %s11, 0
    %p52 = por %p50, %p51
    %p53 = scmp.ne.s32.totalorder %s45, %s47
    %p54 = scmp.eq.s32.totalorder %s16, 3
    %p55 = por %p53, %p54
    %p56 = scmp.ne.s32.totalorder %s47, %s48
    %p57 = scmp.eq.s32.totalorder %s16, 0
    %p58 = por %p56, %p57
    %p59 = scmp.ne.s32.totalorder %s47, %s48
    %p60 = scmp.eq.s32.totalorder %s17, 3
    %p61 = por %p59, %p60
    %p63 = scmp.ne.s32.totalorder %s48, %s62
    %p64 = scmp.eq.s32.totalorder %s17, 0
    %p65 = por %p63, %p64
    %s66 = ssub.s32 %s11, %s18
    %p67 = scmp.eq.s32.totalorder %s66, 0
    %s69 = sadd.s32 %s68, 1
    %s70 = scalar_select %p67, %s68, %s69
    %p73 = pneg %p67
    %p74 = scmp.eq.s32.totalorder %s11, 3
    %p75 = por %p73, %p74
    %p76 = scmp.ne.s32.totalorder %s68, %s71
    %p77 = scmp.eq.s32.totalorder %s11, 0
    %p78 = por %p76, %p77
    %p79 = scmp.ne.s32.totalorder %s68, %s71
    %p80 = scmp.eq.s32.totalorder %s16, 3
    %p81 = por %p79, %p80
    %p82 = scmp.ne.s32.totalorder %s71, %s72
    %p83 = scmp.eq.s32.totalorder %s16, 0
    %p84 = por %p82, %p83
    %p85 = scmp.ne.s32.totalorder %s71, %s72
    %p86 = scmp.eq.s32.totalorder %s17, 3
    %p87 = por %p85, %p86
    %p89 = scmp.ne.s32.totalorder %s72, %s88
    %p90 = scmp.eq.s32.totalorder %s17, 0
    %p91 = por %p89, %p90
    %s93 = sadd.s32 %s92, 1
    %p96 = scmp.eq.s32.totalorder %s11, 3
    %p97 = scmp.ne.s32.totalorder %s92, %s94
    %p98 = scmp.eq.s32.totalorder %s11, 0
    %p99 = por %p97, %p98
    %p100 = scmp.ne.s32.totalorder %s92, %s94
    %p101 = scmp.eq.s32.totalorder %s16, 3
    %p102 = por %p100, %p101
    %p103 = scmp.ne.s32.totalorder %s94, %s95
    %p104 = scmp.eq.s32.totalorder %s16, 0
    %p105 = por %p103, %p104
    %p106 = scmp.ne.s32.totalorder %s94, %s95
    %p107 = scmp.eq.s32.totalorder %s17, 3
    %p108 = por %p106, %p107
    %p110 = scmp.ne.s32.totalorder %s95, %s109
    %p111 = scmp.eq.s32.totalorder %s17, 0
    %p112 = por %p110, %p111
    %s114 = sadd.s32 %s113, 1
    %p117 = scmp.eq.s32.totalorder %s11, 3
    %p118 = scmp.ne.s32.totalorder %s113, %s115
    %p119 = scmp.eq.s32.totalorder %s11, 0
    %p120 = por %p118, %p119
    %p121 = scmp.ne.s32.totalorder %s113, %s115
    %p122 = scmp.eq.s32.totalorder %s16, 3
    %p123 = por %p121, %p122
    %p124 = scmp.ne.s32.totalorder %s115, %s116
    %p125 = scmp.eq.s32.totalorder %s16, 0
    %p126 = por %p124, %p125
    %p127 = scmp.ne.s32.totalorder %s115, %s116
    %p128 = scmp.eq.s32.totalorder %s17, 3
    %p129 = por %p127, %p128
    %p131 = scmp.ne.s32.totalorder %s116, %s130
    %p132 = scmp.eq.s32.totalorder %s17, 0
    %p133 = por %p131, %p132
    %p134 = scmp.le.s32.totalorder 1, %s11
    %p135 = scmp.lt.s32.totalorder %s11, 5
    %p136 = pnand %p134, %p135
    %p137 = pneg %p136
    // Predicated region
    $region9: #{down_conv2d.2} parent=5 // pred_check
      _
    $region10: #{down_conv2d.2} parent=5 // pred_check_branch
      %139 = sbr.rel (%p136) target = $region12
    $region11: #{down_conv2d.2} parent=5 // pred_region
      %s140 = ssub.s32 %s11, 1
      // Predicated region
      $region13: #{down_conv2d.2} parent=11 // pred_check
        %p141 = pneg %p58
      $region14: #{down_conv2d.2} parent=11 // pred_check_branch
        %143 = sbr.rel (%p141) target = $region16
      $region15: #{down_conv2d.2} parent=11 // pred_region
        _
      $region16: #{down_conv2d.2} parent=11 // pred_fallthru
        _
    $region12: #{down_conv2d.2} parent=5 // pred_fallthru
      _
    %p144 = scmp.lt.s32.totalorder %s11, 4
    // Predicated region
    $region17: #{down_conv2d.2} parent=5 // pred_check
      %p145 = pneg %p144
    $region18: #{down_conv2d.2} parent=5 // pred_check_branch
      %147 = sbr.rel (%p145) target = $region20
    $region19: #{down_conv2d.2} parent=5 // pred_region
      // Predicated region
      $region21: #{down_conv2d.2} parent=19 // pred_check
        %p148 = pneg %p31
      $region22: #{down_conv2d.2} parent=19 // pred_check_branch
        %150 = sbr.rel (%p148) target = $region24
      $region23: #{down_conv2d.2} parent=19 // pred_region
        %s151 = smul.u32 16, %s11
        %p152 = scmp.lt.s32.totalorder %s151, 63
        %s153 = scalar_select %p152, %s151, 63
        %s154 = smul.addr %s153, 4
        %s155 = scalar_lea.vmem %s0, %s154
        %s156 = smul.u32 16, %s11
      $region24: #{down_conv2d.2} parent=19 // pred_fallthru
        _
    $region20: #{down_conv2d.2} parent=5 // pred_fallthru
      _
    %p157 = scmp.le.s32.totalorder 1, %s11
    %p158 = scmp.lt.s32.totalorder %s11, 5
    %p159 = pnand %p157, %p158
    %p160 = pneg %p159
    // Predicated region
    $region25: #{down_conv2d.2} parent=5 // pred_check
      _
    $region26: #{down_conv2d.2} parent=5 // pred_check_branch
      %162 = sbr.rel (%p159) target = $region28
    $region27: #{down_conv2d.2} parent=5 // pred_region
      %s163 = ssub.s32 %s11, 1
      %s164 = smul.u32 16, %s16
      %p165 = scmp.lt.s32.totalorder %s164, 63
      %s166 = scalar_select %p165, %s164, 63
      %s167 = smul.addr %s166, 4
      %s168 = scalar_lea.vmem %s0, %s167
      %p169 = pneg %p37
      %p170 = pneg %p34
      %p171 = pneg %p58
      %p172 = pneg %p55
      %p173 = pneg %p84
      %p174 = pneg %p81
      %s175 = smul.u32 16, %s16
      %p176 = scmp.lt.s32.totalorder %s175, 63
      %s177 = scalar_select %p176, %s175, 63
      %s178 = smul.addr %s177, 8
      %s179 = scalar_lea.vmem %s2, %s178
      %p180 = pneg %p105
      %p181 = pneg %p102
      %p182 = pneg %p126
      %p183 = pneg %p123
      %s184 = smul.u32 16, %s16
      %p185 = scmp.lt.s32.totalorder %s184, 63
      %s186 = scalar_select %p185, %s184, 63
      %s187 = smul.addr %s186, 4
      %s188 = scalar_lea.vmem %s0, %s187
      %s189 = smul.u32 16, %s16
      %s190 = smul.u32 16, %s16
      %p191 = scmp.lt.s32.totalorder %s190, 63
      %s192 = scalar_select %p191, %s190, 63
      %s193 = smul.addr %s192, 8
      %s194 = scalar_lea.vmem %s2, %s193
      %s195 = smul.u32 16, %s16
      %p197 = scmp.eq.s32.totalorder %s16, 0
      // Predicated region
      $region29: #{down_conv2d.2} parent=27 // pred_check
        %p198 = pneg %p197
      $region30: #{down_conv2d.2} parent=27 // pred_check_branch
        %200 = sbr.rel (%p198) target = $region32
      $region31: #{down_conv2d.2} parent=27 // pred_region
        %201 = vst [vmem:[%s3] sm:$0x1] 0.0
        %202 = vst [vmem:[%s4] sm:$0x1] 0.0
      $region32: #{down_conv2d.2} parent=27 // pred_fallthru
        _
      %v203 = vld [vmem:[%s188] sm:$0xf]
      %v204 = vld [vmem:[%s188 + $0x4] sm:$0xf]
      %v205 = vld [vmem:[%s188 + $0x8] sm:$0xf]
      %v206 = vld [vmem:[%s188 + $0xc] sm:$0xf]
      %v207 = vld [vmem:[%s188 + $0x10] sm:$0xf]
      %v208 = vld [vmem:[%s188 + $0x14] sm:$0xf]
      %v209 = vld [vmem:[%s188 + $0x18] sm:$0xf]
      %v210 = vld [vmem:[%s188 + $0x1c] sm:$0xf]
      %v211 = vld [vmem:[%s188 + $0x20] sm:$0xf]
      %v212 = vld [vmem:[%s188 + $0x24] sm:$0xf]
      %v213 = vld [vmem:[%s188 + $0x28] sm:$0xf]
      %v214 = vld [vmem:[%s188 + $0x2c] sm:$0xf]
      %v215 = vld [vmem:[%s188 + $0x30] sm:$0xf]
      %v216 = vld [vmem:[%s188 + $0x34] sm:$0xf]
      %v217 = vld [vmem:[%s188 + $0x38] sm:$0xf]
      %v218 = vld [vmem:[%s188 + $0x3c] sm:$0xf]
      %v219 = vld [vmem:[%s1] sm:$0xf]
      %v220 = vld [vmem:[%s1 + $0x4] sm:$0xf]
      %v221 = vld [vmem:[%s1 + $0x8] sm:$0xf]
      %v222 = vld [vmem:[%s1 + $0xc] sm:$0xf]
      %v223 = vld [vmem:[%s1 + $0x10] sm:$0xf]
      %v224 = vld [vmem:[%s1 + $0x14] sm:$0xf]
      %v225 = vld [vmem:[%s1 + $0x18] sm:$0xf]
      %v226 = vld [vmem:[%s1 + $0x1c] sm:$0xf]
      %v227 = vld [vmem:[%s1 + $0x20] sm:$0xf]
      %v228 = vld [vmem:[%s1 + $0x24] sm:$0xf]
      %v229 = vld [vmem:[%s1 + $0x28] sm:$0xf]
      %v230 = vld [vmem:[%s1 + $0x2c] sm:$0xf]
      %v231 = vld [vmem:[%s1 + $0x30] sm:$0xf]
      %v232 = vld [vmem:[%s1 + $0x34] sm:$0xf]
      %v233 = vld [vmem:[%s1 + $0x38] sm:$0xf]
      %v234 = vld [vmem:[%s1 + $0x3c] sm:$0xf]
      %v251 = vunpack.c.l.b16 %v203
      %v252 = vunpack.c.l.b16 %v204
      %v253 = vunpack.c.l.b16 %v205
      %v254 = vunpack.c.l.b16 %v206
      %v255 = vunpack.c.l.b16 %v207
      %v256 = vunpack.c.l.b16 %v208
      %v257 = vunpack.c.l.b16 %v209
      %v258 = vunpack.c.l.b16 %v210
      %v259 = vunpack.c.l.b16 %v211
      %v260 = vunpack.c.l.b16 %v212
      %v261 = vunpack.c.l.b16 %v213
      %v262 = vunpack.c.l.b16 %v214
      %v263 = vunpack.c.l.b16 %v215
      %v264 = vunpack.c.l.b16 %v216
      %v265 = vunpack.c.l.b16 %v217
      %v266 = vunpack.c.l.b16 %v218
      %v267 = vpack.c.b16 %v252, %v251
      %v268 = vpack.c.b16 %v254, %v253
      %v269 = vpack.c.b16 %v256, %v255
      %v270 = vpack.c.b16 %v258, %v257
      %v271 = vpack.c.b16 %v260, %v259
      %v272 = vpack.c.b16 %v262, %v261
      %v273 = vpack.c.b16 %v264, %v263
      %v274 = vpack.c.b16 %v266, %v265
      %v299 = vunpack.c.l.b16 %v219
      %v300 = vunpack.c.l.b16 %v220
      %v301 = vunpack.c.l.b16 %v221
      %v302 = vunpack.c.l.b16 %v222
      %v303 = vunpack.c.l.b16 %v223
      %v304 = vunpack.c.l.b16 %v224
      %v305 = vunpack.c.l.b16 %v225
      %v306 = vunpack.c.l.b16 %v226
      %v307 = vunpack.c.l.b16 %v227
      %v308 = vunpack.c.l.b16 %v228
      %v309 = vunpack.c.l.b16 %v229
      %v310 = vunpack.c.l.b16 %v230
      %v311 = vunpack.c.l.b16 %v231
      %v312 = vunpack.c.l.b16 %v232
      %v313 = vunpack.c.l.b16 %v233
      %v314 = vunpack.c.l.b16 %v234
      %v315 = vpack.c.b16 %v300, %v299
      %v316 = vpack.c.b16 %v302, %v301
      %v317 = vpack.c.b16 %v304, %v303
      %v318 = vpack.c.b16 %v306, %v305
      %v319 = vpack.c.b16 %v308, %v307
      %v320 = vpack.c.b16 %v310, %v309
      %v321 = vpack.c.b16 %v312, %v311
      %v322 = vpack.c.b16 %v314, %v313
      %331 = vmatprep.subr.bf16.mxu0 0
      %332 = vmatpush1.bf16.msra.mxu0 %v315
      %333 = vmatprep.subr.bf16.mxu0 0
      %334 = vmatpush1.bf16.msra.mxu0 %v316
      %335 = vmatprep.subr.bf16.mxu0 0
      %336 = vmatpush1.bf16.msra.mxu0 %v317
      %337 = vmatprep.subr.bf16.mxu0 0
      %338 = vmatpush1.bf16.msra.mxu0 %v318
      %339 = vmatprep.subr.bf16.mxu0 0
      %340 = vmatpush1.bf16.msra.mxu0 %v319
      %341 = vmatprep.subr.bf16.mxu0 0
      %342 = vmatpush1.bf16.msra.mxu0 %v320
      %343 = vmatprep.subr.bf16.mxu0 0
      %344 = vmatpush1.bf16.msra.mxu0 %v321
      %345 = vmatprep.subr.bf16.mxu0 0
      %346 = vmatpush1.bf16.msra.mxu0 %v322
      %347 = vmatprep.subr.bf16.mxu0 0
      %348 = vmatpush1.bf16.msra.mxu0 0
      %349 = vmatprep.subr.bf16.mxu0 0
      %350 = vmatpush1.bf16.msra.mxu0 0
      %351 = vmatprep.subr.bf16.mxu0 0
      %352 = vmatpush1.bf16.msra.mxu0 0
      %353 = vmatprep.subr.bf16.mxu0 0
      %354 = vmatpush1.bf16.msra.mxu0 0
      %355 = vmatprep.subr.bf16.mxu0 0
      %356 = vmatpush1.bf16.msra.mxu0 0
      %357 = vmatprep.subr.bf16.mxu0 0
      %358 = vmatpush1.bf16.msra.mxu0 0
      %359 = vmatprep.subr.bf16.mxu0 0
      %360 = vmatpush1.bf16.msra.mxu0 0
      %361 = vmatprep.subr.bf16.mxu0 0
      %362 = vmatpush1.bf16.msra.mxu0 0
      %363 = vmatprep.mubr.bf16.mxu0 0
      %364 = vmatmul.mubr.bf16.gmra.mrb[0].mxu0 %v267
      %v365 = vpop.f32.mrb[0].mxu0
      %v366 = vadd.f32 0.0, %v365
      %v367 = vpop.f32.mrb[0].mxu0
      %v368 = vpop.f32.mrb[0].mxu0
      %v369 = vadd.f32 0.0, %v368
      %v370 = vpop.f32.mrb[0].mxu0
      %371 = vmatprep.mubr.bf16.mxu0 0
      %372 = vmatmul.mubr.bf16.gmra.mrb[0].mxu0 %v268
      %v373 = vpop.f32.mrb[0].mxu0
      %v374 = vadd.f32 0.0, %v373
      %v375 = vpop.f32.mrb[0].mxu0
      %v376 = vpop.f32.mrb[0].mxu0
      %v377 = vadd.f32 0.0, %v376
      %v378 = vpop.f32.mrb[0].mxu0
      %379 = vmatprep.mubr.bf16.mxu0 0
      %380 = vmatmul.mubr.bf16.gmra.mrb[0].mxu0 %v269
      %v381 = vpop.f32.mrb[0].mxu0
      %v382 = vadd.f32 0.0, %v381
      %v383 = vpop.f32.mrb[0].mxu0
      %v384 = vpop.f32.mrb[0].mxu0
      %v385 = vadd.f32 0.0, %v384
      %v386 = vpop.f32.mrb[0].mxu0
      %387 = vmatprep.mubr.bf16.mxu0 0
      %388 = vmatmul.mubr.bf16.gmra.mrb[0].mxu0 %v270
      %v389 = vpop.f32.mrb[0].mxu0
      %v390 = vadd.f32 0.0, %v389
      %v391 = vpop.f32.mrb[0].mxu0
      %v392 = vpop.f32.mrb[0].mxu0
      %v393 = vadd.f32 0.0, %v392
      %v394 = vpop.f32.mrb[0].mxu0
      %395 = vmatprep.mubr.bf16.mxu0 0
      %396 = vmatmul.mubr.bf16.gmra.mrb[0].mxu0 %v271
      %v397 = vpop.f32.mrb[0].mxu0
      %v398 = vadd.f32 0.0, %v397
      %v399 = vpop.f32.mrb[0].mxu0
      %v400 = vpop.f32.mrb[0].mxu0
      %v401 = vadd.f32 0.0, %v400
      %v402 = vpop.f32.mrb[0].mxu0
      %403 = vmatprep.mubr.bf16.mxu0 0
      %404 = vmatmul.mubr.bf16.gmra.mrb[0].mxu0 %v272
      %v405 = vpop.f32.mrb[0].mxu0
      %v406 = vadd.f32 0.0, %v405
      %v407 = vpop.f32.mrb[0].mxu0
      %v408 = vpop.f32.mrb[0].mxu0
      %v409 = vadd.f32 0.0, %v408
      %v410 = vpop.f32.mrb[0].mxu0
      %411 = vmatprep.mubr.bf16.mxu0 0
      %412 = vmatmul.mubr.bf16.gmra.mrb[0].mxu0 %v273
      %v413 = vpop.f32.mrb[0].mxu0
      %v414 = vadd.f32 0.0, %v413
      %v415 = vpop.f32.mrb[0].mxu0
      %v416 = vpop.f32.mrb[0].mxu0
      %v417 = vadd.f32 0.0, %v416
      %v418 = vpop.f32.mrb[0].mxu0
      %419 = vmatprep.mubr.bf16.mxu0 0
      %420 = vmatmul.mubr.bf16.gmra.mrb[0].mxu0 %v274
      %v421 = vpop.f32.mrb[0].mxu0
      %v422 = vadd.f32 0.0, %v421
      %v423 = vpop.f32.mrb[0].mxu0
      %v424 = vpop.f32.mrb[0].mxu0
      %v425 = vadd.f32 0.0, %v424
      %v426 = vpop.f32.mrb[0].mxu0
      %427 = vdwg.mxu0
      %428 = vst [vmem:[%s194] sm:$0xff] %v366
      %429 = vst [vmem:[%s194 + $0x8] sm:$0xff] %v369
      %430 = vst [vmem:[%s194 + $0x10] sm:$0xff] %v374
      %431 = vst [vmem:[%s194 + $0x18] sm:$0xff] %v377
      %432 = vst [vmem:[%s194 + $0x20] sm:$0xff] %v382
      %433 = vst [vmem:[%s194 + $0x28] sm:$0xff] %v385
      %434 = vst [vmem:[%s194 + $0x30] sm:$0xff] %v390
      %435 = vst [vmem:[%s194 + $0x38] sm:$0xff] %v393
      %436 = vst [vmem:[%s194 + $0x40] sm:$0xff] %v398
      %437 = vst [vmem:[%s194 + $0x48] sm:$0xff] %v401
      %438 = vst [vmem:[%s194 + $0x50] sm:$0xff] %v406
      %439 = vst [vmem:[%s194 + $0x58] sm:$0xff] %v409
      %440 = vst [vmem:[%s194 + $0x60] sm:$0xff] %v414
      %441 = vst [vmem:[%s194 + $0x68] sm:$0xff] %v417
      %442 = vst [vmem:[%s194 + $0x70] sm:$0xff] %v422
      %443 = vst [vmem:[%s194 + $0x78] sm:$0xff] %v425
      %v444 = vld [vmem:[%s3] sm:$0x1]
      %v445 = vadd.f32 %v366, %v369
      %v446 = vadd.f32 %v445, %v374
      %v447 = vadd.f32 %v446, %v377
      %v448 = vadd.f32 %v447, %v382
      %v449 = vadd.f32 %v448, %v385
      %v450 = vadd.f32 %v449, %v390
      %v451 = vadd.f32 %v450, %v393
      %v452 = vadd.f32 %v451, %v398
      %v453 = vadd.f32 %v452, %v401
      %v454 = vadd.f32 %v453, %v406
      %v455 = vadd.f32 %v454, %v409
      %v456 = vadd.f32 %v455, %v414
      %v457 = vadd.f32 %v456, %v417
      %v458 = vadd.f32 %v457, %v422
      %v459 = vadd.f32 %v458, %v425
      %v460 = vrot.slane %v459, 4
      %v461 = vadd.f32 %v459, %v460
      %v462 = vrot.slane %v461, 2
      %v463 = vadd.f32 %v461, %v462
      %v464 = vrot.slane %v463, 1
      %v465 = vadd.f32 %v463, %v464
      %v466 = vadd.f32 %v444, %v465
      %467 = vst [vmem:[%s3] sm:$0x1] %v466
      %v468 = vld [vmem:[%s4] sm:$0x1]
      %v469 = vmul.f32 %v366, %v366
      %v470 = vmul.f32 %v369, %v369
      %v471 = vmul.f32 %v374, %v374
      %v472 = vmul.f32 %v377, %v377
      %v473 = vmul.f32 %v382, %v382
      %v474 = vmul.f32 %v385, %v385
      %v475 = vmul.f32 %v390, %v390
      %v476 = vmul.f32 %v393, %v393
      %v477 = vmul.f32 %v398, %v398
      %v478 = vmul.f32 %v401, %v401
      %v479 = vmul.f32 %v406, %v406
      %v480 = vmul.f32 %v409, %v409
      %v481 = vmul.f32 %v414, %v414
      %v482 = vmul.f32 %v417, %v417
      %v483 = vmul.f32 %v422, %v422
      %v484 = vmul.f32 %v425, %v425
      %v485 = vadd.f32 %v469, %v470
      %v486 = vadd.f32 %v485, %v471
      %v487 = vadd.f32 %v486, %v472
      %v488 = vadd.f32 %v487, %v473
      %v489 = vadd.f32 %v488, %v474
      %v490 = vadd.f32 %v489, %v475
      %v491 = vadd.f32 %v490, %v476
      %v492 = vadd.f32 %v491, %v477
      %v493 = vadd.f32 %v492, %v478
      %v494 = vadd.f32 %v493, %v479
      %v495 = vadd.f32 %v494, %v480
      %v496 = vadd.f32 %v495, %v481
      %v497 = vadd.f32 %v496, %v482
      %v498 = vadd.f32 %v497, %v483
      %v499 = vadd.f32 %v498, %v484
      %v500 = vrot.slane %v499, 4
      %v501 = vadd.f32 %v499, %v500
      %v502 = vrot.slane %v501, 2
      %v503 = vadd.f32 %v501, %v502
      %v504 = vrot.slane %v503, 1
      %v505 = vadd.f32 %v503, %v504
      %v506 = vadd.f32 %v468, %v505
      %507 = vst [vmem:[%s4] sm:$0x1] %v506
      %s508 = smul.u32 16, %s16
      %p509 = scmp.lt.s32.totalorder %s508, 63
      %s510 = scalar_select %p509, %s508, 63
      %s511 = smul.addr %s510, 8
      %s512 = scalar_lea.vmem %s2, %s511
      // Predicated region
      $region33: #{down_conv2d.2} parent=27 // pred_check
        %p513 = pneg %p81
      $region34: #{down_conv2d.2} parent=27 // pred_check_branch
        %515 = sbr.rel (%p513) target = $region36
      $region35: #{down_conv2d.2} parent=27 // pred_region
        %s516 = smul.u32 16, %s16
      $region36: #{down_conv2d.2} parent=27 // pred_fallthru
        _
      // Predicated region
      $region37: #{down_conv2d.2} parent=27 // pred_check
        %p517 = pneg %p102
      $region38: #{down_conv2d.2} parent=27 // pred_check_branch
        %519 = sbr.rel (%p517) target = $region40
      $region39: #{down_conv2d.2} parent=27 // pred_region
        _
      $region40: #{down_conv2d.2} parent=27 // pred_fallthru
        _
      // Predicated region
      $region41: #{down_conv2d.2} parent=27 // pred_check
        %p520 = pneg %p123
      $region42: #{down_conv2d.2} parent=27 // pred_check_branch
        %522 = sbr.rel (%p520) target = $region44
      $region43: #{down_conv2d.2} parent=27 // pred_region
        _
      $region44: #{down_conv2d.2} parent=27 // pred_fallthru
        _
      // Predicated region
      $region45: #{down_conv2d.2} parent=27 // pred_check
        %p523 = pneg %p102
      $region46: #{down_conv2d.2} parent=27 // pred_check_branch
        %525 = sbr.rel (%p523) target = $region48
      $region47: #{down_conv2d.2} parent=27 // pred_region
        _
      $region48: #{down_conv2d.2} parent=27 // pred_fallthru
        _
      // Predicated region
      $region49: #{down_conv2d.2} parent=27 // pred_check
        %p526 = pneg %p123
      $region50: #{down_conv2d.2} parent=27 // pred_check_branch
        %528 = sbr.rel (%p526) target = $region52
      $region51: #{down_conv2d.2} parent=27 // pred_region
        _
      $region52: #{down_conv2d.2} parent=27 // pred_fallthru
        _
    $region28: #{down_conv2d.2} parent=5 // pred_fallthru
      _
    %p529 = scmp.le.s32.totalorder 2, %s11
    // Predicated region
    $region53: #{down_conv2d.2} parent=5 // pred_check
      %p530 = pneg %p529
    $region54: #{down_conv2d.2} parent=5 // pred_check_branch
      %532 = sbr.rel (%p530) target = $region56
    $region55: #{down_conv2d.2} parent=5 // pred_region
      %s533 = ssub.s32 %s11, 2
      // Predicated region
      $region57: #{down_conv2d.2} parent=55 // pred_check
        %p534 = pneg %p87
      $region58: #{down_conv2d.2} parent=55 // pred_check_branch
        %536 = sbr.rel (%p534) target = $region60
      $region59: #{down_conv2d.2} parent=55 // pred_region
        %s537 = smul.u32 16, %s17
        %p538 = scmp.lt.s32.totalorder %s537, 63
        %s539 = scalar_select %p538, %s537, 63
        %s540 = smul.addr %s539, 8
        %s541 = scalar_lea.vmem %s2, %s540
      $region60: #{down_conv2d.2} parent=55 // pred_fallthru
        _
    $region56: #{down_conv2d.2} parent=5 // pred_fallthru
      _
  $region6: #{down_conv2d.2} parent=0 // loop_footer
    %s15 = sadd.s32 1, %s11
  $region7: #{down_conv2d.2} parent=0 // loop_footer_branch
    %10 = sbr.rel target = $region3
  $region8: #{down_conv2d.2} parent=0 // loop_exit
    _

</llo_original>
